<compile_context>
chip_gen: v7x
topology: tpu7x:2x2x1
jax: 0.10.0
libtpu: 0.0.40
codegen_flags: <defaults>
</compile_context>

<pallas_src>
import jax
import jax.numpy as jnp
from jax.experimental import pallas as pl
from jax.experimental.pallas import tpu as pltpu


def _round_up(n: int, m: int) -> int:
    return ((n + m - 1) // m) * m


def _mlp_kernel(x_ref, w1_ref, b1_ref, w2_ref, b2_ref, o_ref):
    # fc1: (tm, D_in) @ (D_in, H) on the MXU — bf16 operands, f32 accumulation.
    h = jnp.dot(x_ref[...], w1_ref[...], preferred_element_type=jnp.float32)
    # Bias + ReLU in f32 on the VPU; b1 is (1, H) and broadcasts over the batch tile.
    h = jnp.maximum(h + b1_ref[...], 0.0)
    # fc2: downcast the activation to the weight dtype for the MXU, accumulate in f32.
    z = jnp.dot(h.astype(w2_ref.dtype), w2_ref[...],
                preferred_element_type=jnp.float32)
    z = z + b2_ref[...]
    # Sigmoid: exp and (approx) reciprocal both go to the EUP slot.
    o_ref[...] = pl.reciprocal(1.0 + jnp.exp(-z), approx=True).astype(o_ref.dtype)


def multilabel_net_forward(x, w1, b1, w2, b2, *, block_batch=None,
                           compute_dtype=jnp.bfloat16):
    """Fused forward pass of MultiLabelNet.

    x : (B, D_in) f32
    w1: (D_in, H)      b1: (H,)
    w2: (H, D_out)     b2: (D_out,)
    Returns (B, D_out) f32 sigmoid probabilities.
    """
    B, D_in = x.shape
    H = w1.shape[1]
    D_out = w2.shape[1]

    # Lane-dense padding: round every feature dim up to a multiple of 128.
    D_in_p = _round_up(D_in, 128)
    H_p = _round_up(H, 128)
    D_out_p = _round_up(D_out, 128)

    # Batch tiling: tm rows per grid step (multiple of 8 sublanes).
    if block_batch is None:
        block_batch = min(128, _round_up(B, 8))
    tm = _round_up(block_batch, 8)
    B_p = _round_up(B, tm)
    grid = (B_p // tm,)

    # Zero-pad + cast matmul operands to bf16; biases stay f32 (f32 epilogue).
    x_p = jnp.pad(x, ((0, B_p - B), (0, D_in_p - D_in))).astype(compute_dtype)
    w1_p = jnp.pad(w1, ((0, D_in_p - D_in), (0, H_p - H))).astype(compute_dtype)
    w2_p = jnp.pad(w2, ((0, H_p - H), (0, D_out_p - D_out))).astype(compute_dtype)
    b1_p = jnp.pad(b1, (0, H_p - H)).reshape(1, H_p).astype(jnp.float32)
    b2_p = jnp.pad(b2, (0, D_out_p - D_out)).reshape(1, D_out_p).astype(jnp.float32)

    flops = 2 * B_p * D_in_p * H_p + 2 * B_p * H_p * D_out_p
    bytes_accessed = (x_p.size * 2 + w1_p.size * 2 + w2_p.size * 2
                      + b1_p.size * 4 + b2_p.size * 4 + B_p * D_out_p * 4)

    out_p = pl.pallas_call(
        _mlp_kernel,
        out_shape=jax.ShapeDtypeStruct((B_p, D_out_p), jnp.float32),
        grid_spec=pltpu.PrefetchScalarGridSpec(
            num_scalar_prefetch=0,
            grid=grid,
            in_specs=[
                pl.BlockSpec((tm, D_in_p), lambda i: (i, 0)),    # x batch tile
                pl.BlockSpec((D_in_p, H_p), lambda i: (0, 0)),   # w1 (VMEM-resident)
                pl.BlockSpec((1, H_p), lambda i: (0, 0)),        # b1
                pl.BlockSpec((H_p, D_out_p), lambda i: (0, 0)),  # w2 (VMEM-resident)
                pl.BlockSpec((1, D_out_p), lambda i: (0, 0)),    # b2
            ],
            out_specs=pl.BlockSpec((tm, D_out_p), lambda i: (i, 0)),
        ),
        compiler_params=pltpu.CompilerParams(
            # Batch tiles are independent -> shard across v7x's 2 TensorCores;
            # harmless on v5e/v6e.
            dimension_semantics=("parallel",),
        ),
        cost_estimate=pl.CostEstimate(
            flops=flops,
            transcendentals=B_p * D_out_p,
            bytes_accessed=bytes_accessed,
        ),
    )(x_p, w1_p, b1_p, w2_p, b2_p)

    # Slice away batch and lane padding.
    return out_p[:B, :D_out]
    # TODO(synk): for very large D_in/H, add a K grid axis with a VMEM f32 accumulator
    # (P1+P3) and re-derive tile sizes against v7x's 64 MiB VMEM.


def init_params(key, input_size, hidden_size, output_size):
    """Deterministic init mimicking nn.Linear's uniform(-1/sqrt(fan_in), +1/sqrt(fan_in)).
    Weights are stored (in_features, out_features) so the kernel computes x @ W + b."""
    k1, k2, k3, k4 = jax.random.split(key, 4)
    lim1 = 1.0 / jnp.sqrt(input_size)
    lim2 = 1.0 / jnp.sqrt(hidden_size)
    w1 = jax.random.uniform(k1, (input_size, hidden_size), jnp.float32, -lim1, lim1)
    b1 = jax.random.uniform(k2, (hidden_size,), jnp.float32, -lim1, lim1)
    w2 = jax.random.uniform(k3, (hidden_size, output_size), jnp.float32, -lim2, lim2)
    b2 = jax.random.uniform(k4, (output_size,), jnp.float32, -lim2, lim2)
    return w1, b1, w2, b2


if __name__ == "__main__":
    batch = 64
    input_size = 16
    hidden_size = 32
    output_size = 4

    key = jax.random.PRNGKey(0)
    kx, kp = jax.random.split(key)
    x = jax.random.normal(kx, (batch, input_size), jnp.float32)
    w1, b1, w2, b2 = init_params(kp, input_size, hidden_size, output_size)

    # block_batch=32 -> grid=(2,): exercises the pipelined / parallel batch axis.
    out = multilabel_net_forward(x, w1, b1, w2, b2, block_batch=32)
    out = jax.block_until_ready(out)

    # Reference in plain JAX f32 (same math as the PyTorch module).  Tolerance covers
    # bf16 operand rounding and the approx reciprocal in the sigmoid.
    ref = jax.nn.sigmoid(jnp.maximum(x @ w1 + b1, 0.0) @ w2 + b2)
    assert out.shape == (batch, output_size)
    assert bool(jnp.all(jnp.isfinite(out)))
    max_err = float(jnp.max(jnp.abs(out - ref)))
    assert max_err < 2e-2, f"max abs error {max_err}"

    print("KERNEL_OK")
</pallas_src>

<mosaic_0001>
module attributes {stable_mosaic.version = 11 : i64} {
  func.func @_mlp_kernel(%arg0: i32, %arg1: memref<32x128xbf16, #tpu.memory_space<vmem>>, %arg2: memref<128x128xbf16, #tpu.memory_space<vmem>>, %arg3: memref<1x128xf32, #tpu.memory_space<vmem>>, %arg4: memref<128x128xbf16, #tpu.memory_space<vmem>>, %arg5: memref<1x128xf32, #tpu.memory_space<vmem>>, %arg6: memref<32x128xf32, #tpu.memory_space<vmem>>) attributes {dimension_semantics = [#tpu.dimension_semantics<parallel>], iteration_bounds = array<i64: 2>, scalar_prefetch = 0 : i64, scratch_operands = 0 : i64, tpu.core_type = #tpu.core_type<tc>, window_params = [{transform_indices = @transform_0, window_bounds = array<i64: 32, 128>}, {pipeline_mode = #tpu.pipeline_mode<synchronous>, transform_indices = @transform_1, window_bounds = array<i64: 128, 128>}, {pipeline_mode = #tpu.pipeline_mode<synchronous>, transform_indices = @transform_2, window_bounds = array<i64: 1, 128>}, {pipeline_mode = #tpu.pipeline_mode<synchronous>, transform_indices = @transform_3, window_bounds = array<i64: 128, 128>}, {pipeline_mode = #tpu.pipeline_mode<synchronous>, transform_indices = @transform_4, window_bounds = array<i64: 1, 128>}, {transform_indices = @transform_5, window_bounds = array<i64: 32, 128>}]} {
    %c0 = arith.constant 0 : index
    %c0_0 = arith.constant 0 : index
    %0 = vector.load %arg1[%c0, %c0_0] : memref<32x128xbf16, #tpu.memory_space<vmem>>, vector<32x128xbf16>
    %c0_1 = arith.constant 0 : index
    %c0_2 = arith.constant 0 : index
    %1 = vector.load %arg2[%c0_1, %c0_2] : memref<128x128xbf16, #tpu.memory_space<vmem>>, vector<128x128xbf16>
    %cst = arith.constant dense<0.000000e+00> : vector<32x128xf32>
    %2 = tpu.matmul %0, %1, %cst {dimension_numbers = #tpu.dot_dimension_numbers<[1], [0], [0], [1], [0, 0, 1, 1], [], []>} : vector<32x128xbf16>, vector<128x128xbf16>, vector<32x128xf32> -> vector<32x128xf32>
    %c0_3 = arith.constant 0 : index
    %c0_4 = arith.constant 0 : index
    %3 = vector.load %arg3[%c0_3, %c0_4] : memref<1x128xf32, #tpu.memory_space<vmem>>, vector<1x128xf32>
    %4 = vector.broadcast %3 : vector<1x128xf32> to vector<32x128xf32>
    %5 = arith.addf %2, %4 : vector<32x128xf32>
    %cst_5 = arith.constant 0.000000e+00 : f32
    %6 = vector.broadcast %cst_5 : f32 to vector<32x128xf32>
    %7 = arith.maximumf %5, %6 : vector<32x128xf32>
    %8 = arith.truncf %7 : vector<32x128xf32> to vector<32x128xbf16>
    %c0_6 = arith.constant 0 : index
    %c0_7 = arith.constant 0 : index
    %9 = vector.load %arg4[%c0_6, %c0_7] : memref<128x128xbf16, #tpu.memory_space<vmem>>, vector<128x128xbf16>
    %cst_8 = arith.constant dense<0.000000e+00> : vector<32x128xf32>
    %10 = tpu.matmul %8, %9, %cst_8 {dimension_numbers = #tpu.dot_dimension_numbers<[1], [0], [0], [1], [0, 0, 1, 1], [], []>} : vector<32x128xbf16>, vector<128x128xbf16>, vector<32x128xf32> -> vector<32x128xf32>
    %c0_9 = arith.constant 0 : index
    %c0_10 = arith.constant 0 : index
    %11 = vector.load %arg5[%c0_9, %c0_10] : memref<1x128xf32, #tpu.memory_space<vmem>>, vector<1x128xf32>
    %12 = vector.broadcast %11 : vector<1x128xf32> to vector<32x128xf32>
    %13 = arith.addf %10, %12 : vector<32x128xf32>
    %cst_11 = arith.constant 0.000000e+00 : f32
    %14 = vector.broadcast %cst_11 : f32 to vector<32x128xf32>
    %15 = arith.subf %14, %13 : vector<32x128xf32>
    %16 = math.exp %15 : vector<32x128xf32>
    %cst_12 = arith.constant 1.000000e+00 : f32
    %17 = vector.broadcast %cst_12 : f32 to vector<32x128xf32>
    %18 = arith.addf %17, %16 : vector<32x128xf32>
    %19 = tpu.reciprocal %18 {approx = true} : vector<32x128xf32> -> vector<32x128xf32>
    %c0_13 = arith.constant 0 : index
    %c0_14 = arith.constant 0 : index
    %20 = vector.load %arg6[%c0_13, %c0_14] : memref<32x128xf32, #tpu.memory_space<vmem>>, vector<32x128xf32>
    tpu.vector_store %arg6[%c0_13, %c0_14], %19 {strides = array<i32>} : memref<32x128xf32, #tpu.memory_space<vmem>>, vector<32x128xf32>,
    return
  }
  func.func @transform_0(%arg0: i32) -> (i32, i32) {
    %c0_i32 = arith.constant 0 : i32
    %c0_i32_0 = arith.constant 0 : i32
    return %arg0, %c0_i32 : i32, i32
  }
  func.func @transform_1(%arg0: i32) -> (i32, i32) {
    %c0_i32 = arith.constant 0 : i32
    %c0_i32_0 = arith.constant 0 : i32
    %c0_i32_1 = arith.constant 0 : i32
    return %c0_i32, %c0_i32_0 : i32, i32
  }
  func.func @transform_2(%arg0: i32) -> (i32, i32) {
    %c0_i32 = arith.constant 0 : i32
    %c0_i32_0 = arith.constant 0 : i32
    %c0_i32_1 = arith.constant 0 : i32
    return %c0_i32, %c0_i32_0 : i32, i32
  }
  func.func @transform_3(%arg0: i32) -> (i32, i32) {
    %c0_i32 = arith.constant 0 : i32
    %c0_i32_0 = arith.constant 0 : i32
    %c0_i32_1 = arith.constant 0 : i32
    return %c0_i32, %c0_i32_0 : i32, i32
  }
  func.func @transform_4(%arg0: i32) -> (i32, i32) {
    %c0_i32 = arith.constant 0 : i32
    %c0_i32_0 = arith.constant 0 : i32
    %c0_i32_1 = arith.constant 0 : i32
    return %c0_i32, %c0_i32_0 : i32, i32
  }
  func.func @transform_5(%arg0: i32) -> (i32, i32) {
    %c0_i32 = arith.constant 0 : i32
    %c0_i32_0 = arith.constant 0 : i32
    return %arg0, %c0_i32 : i32, i32
  }
}

</mosaic_0001>

<llo_original>
// kernel: tpu_custom_call.1
$region0: #{tpu_custom_call.1}
  #allocation0 [shape = 'u32[]', space=smem, size = 0x4, offset = 0x4, fixed_abs, tag = 'smem constant byte address 0x4 - core index']
  #allocation1 [shape = 'u32[144,128]{1,0:T(1,128)}', space=vmem, size = 0x12000, scoped, tag = 'internal scratch']
  %s0 = inlined_call_operand.hbm [shape: bf16[64,128], index: 0, kind: input, shape index: {}]
  %s1 = inlined_call_operand.hbm [shape: bf16[128,128], index: 1, kind: input, shape index: {}]
  %s2 = inlined_call_operand.vmem [shape: f32[1,128], index: 2, kind: input, shape index: {}]
  %s3 = inlined_call_operand.hbm [shape: bf16[128,128], index: 3, kind: input, shape index: {}]
  %s4 = inlined_call_operand.vmem [shape: f32[1,128], index: 4, kind: input, shape index: {}]
  %s5 = inlined_call_operand.hbm [shape: f32[64,128], index: 5, kind: output, shape index: {}]
  %s6 = sld [smem:[#allocation0]]
  $region65: #{tpu_custom_call.1} parent=0
    _
  %s8 = ssub.s32 1, %s6
  %s9 = scalar_select 0, %s8, %s6
  $region1: #{tpu_custom_call.1} parent=0
    #allocation2 [shape = 'u8[16384]{0}', space=vmem, size = 0x4000, scoped, tag = 'input window, operand 0']
    #allocation3 [shape = 's32[2]{0}', space=sflag, size = 0x8, scoped, tag = 'scoped memory for tpu_custom_call.1']
    #allocation4 [shape = 's32[2]{0}', space=sflag, size = 0x8, scoped, tag = 'scoped memory for tpu_custom_call.1']
    #allocation5 [shape = 'u8[32768]{0}', space=vmem, size = 0x8000, scoped, tag = 'input window, operand 1, single buffered']
    #allocation6 [shape = 's32[1]{0}', space=sflag, size = 0x4, scoped, tag = 'scoped memory for tpu_custom_call.1']
    #allocation7 [shape = 'u8[32768]{0}', space=vmem, size = 0x8000, scoped, tag = 'input window, operand 3, single buffered']
    #allocation8 [shape = 'u8[32768]{0}', space=vmem, size = 0x8000, scoped, tag = 'output window, operand 0']
    %10 = vsyncpa [#allocation3], 0
    %s11 = scalar_lea.sflag [#allocation3], 1
    %12 = vsyncpa %s11, 0
    %13 = vsyncpa [#allocation6], 0
    %14 = vsyncpa [#allocation4], 0
    %s15 = scalar_lea.sflag [#allocation4], 1
    %16 = vsyncpa %s15, 0
    loop: start=0, step=1, limit=4
    $region2: #{tpu_custom_call.1} parent=1 // loop_pre_header
      _
    $region3: #{tpu_custom_call.1} parent=1 // loop_header
      %s18 = sphi 0, %s22
      %p19 = scmp.ge.s32.totalorder %s18, 4
      %s28 = sphi 0, %s30
      %s31 = sphi 0, %s28
      %s32 = sphi 0, %s31
      %s48 = sphi 0, %s32
      %s52 = sphi 0, %s52
      %s54 = sphi 0, %s52
      %s55 = sphi 0, %s54
      %s69 = sphi 0, %s55
      %s73 = sphi 0, %s73
      %s75 = sphi 0, %s73
      %s76 = sphi 0, %s75
      %s90 = sphi 0, %s76
      %s94 = sphi 0, %s94
      %s96 = sphi 0, %s94
      %s97 = sphi 0, %s96
      %s111 = sphi 0, %s97
      %s115 = sphi 0, %s115
      %s117 = sphi 0, %s115
      %s118 = sphi 0, %s117
      %s132 = sphi 0, %s118
      %s138 = sphi 0, %s140
      %s141 = sphi 0, %s138
      %s142 = sphi 0, %s141
      %s158 = sphi 0, %s142
    $region4: #{tpu_custom_call.1} parent=1 // loop_header_branch
      %21 = sbr.rel (%p19) target = $region8
    $region5: #{tpu_custom_call.1} parent=1 // loop_body
      %s23 = ssub.s32 %s18, 1
      %s24 = ssub.s32 %s18, 2
      %s25 = sadd.s32 %s18, 1
      %s26 = ssub.s32 %s18, %s25
      %p27 = scmp.eq.s32.totalorder %s26, 0
      %s29 = sadd.s32 %s28, 1
      %s30 = scalar_select %p27, %s28, %s29
      %p33 = pneg %p27
      %p34 = scmp.eq.s32.totalorder %s18, 1
      %p35 = por %p33, %p34
      %p36 = scmp.ne.s32.totalorder %s28, %s31
      %p37 = scmp.eq.s32.totalorder %s18, 0
      %p38 = por %p36, %p37
      %p39 = scmp.ne.s32.totalorder %s28, %s31
      %p40 = scmp.eq.s32.totalorder %s23, 1
      %p41 = por %p39, %p40
      %p42 = scmp.ne.s32.totalorder %s31, %s32
      %p43 = scmp.eq.s32.totalorder %s23, 0
      %p44 = por %p42, %p43
      %p45 = scmp.ne.s32.totalorder %s31, %s32
      %p46 = scmp.eq.s32.totalorder %s24, 1
      %p47 = por %p45, %p46
      %p49 = scmp.ne.s32.totalorder %s32, %s48
      %p50 = scmp.eq.s32.totalorder %s24, 0
      %p51 = por %p49, %p50
      %s53 = sadd.s32 %s52, 1
      %p56 = scmp.eq.s32.totalorder %s18, 1
      %p57 = scmp.ne.s32.totalorder %s52, %s54
      %p58 = scmp.eq.s32.totalorder %s18, 0
      %p59 = por %p57, %p58
      %p60 = scmp.ne.s32.totalorder %s52, %s54
      %p61 = scmp.eq.s32.totalorder %s23, 1
      %p62 = por %p60, %p61
      %p63 = scmp.ne.s32.totalorder %s54, %s55
      %p64 = scmp.eq.s32.totalorder %s23, 0
      %p65 = por %p63, %p64
      %p66 = scmp.ne.s32.totalorder %s54, %s55
      %p67 = scmp.eq.s32.totalorder %s24, 1
      %p68 = por %p66, %p67
      %p70 = scmp.ne.s32.totalorder %s55, %s69
      %p71 = scmp.eq.s32.totalorder %s24, 0
      %p72 = por %p70, %p71
      %s74 = sadd.s32 %s73, 1
      %p77 = scmp.eq.s32.totalorder %s18, 1
      %p78 = scmp.ne.s32.totalorder %s73, %s75
      %p79 = scmp.eq.s32.totalorder %s18, 0
      %p80 = por %p78, %p79
      %p81 = scmp.ne.s32.totalorder %s73, %s75
      %p82 = scmp.eq.s32.totalorder %s23, 1
      %p83 = por %p81, %p82
      %p84 = scmp.ne.s32.totalorder %s75, %s76
      %p85 = scmp.eq.s32.totalorder %s23, 0
      %p86 = por %p84, %p85
      %p87 = scmp.ne.s32.totalorder %s75, %s76
      %p88 = scmp.eq.s32.totalorder %s24, 1
      %p89 = por %p87, %p88
      %p91 = scmp.ne.s32.totalorder %s76, %s90
      %p92 = scmp.eq.s32.totalorder %s24, 0
      %p93 = por %p91, %p92
      %s95 = sadd.s32 %s94, 1
      %p98 = scmp.eq.s32.totalorder %s18, 1
      %p99 = scmp.ne.s32.totalorder %s94, %s96
      %p100 = scmp.eq.s32.totalorder %s18, 0
      %p101 = por %p99, %p100
      %p102 = scmp.ne.s32.totalorder %s94, %s96
      %p103 = scmp.eq.s32.totalorder %s23, 1
      %p104 = por %p102, %p103
      %p105 = scmp.ne.s32.totalorder %s96, %s97
      %p106 = scmp.eq.s32.totalorder %s23, 0
      %p107 = por %p105, %p106
      %p108 = scmp.ne.s32.totalorder %s96, %s97
      %p109 = scmp.eq.s32.totalorder %s24, 1
      %p110 = por %p108, %p109
      %p112 = scmp.ne.s32.totalorder %s97, %s111
      %p113 = scmp.eq.s32.totalorder %s24, 0
      %p114 = por %p112, %p113
      %s116 = sadd.s32 %s115, 1
      %p119 = scmp.eq.s32.totalorder %s18, 1
      %p120 = scmp.ne.s32.totalorder %s115, %s117
      %p121 = scmp.eq.s32.totalorder %s18, 0
      %p122 = por %p120, %p121
      %p123 = scmp.ne.s32.totalorder %s115, %s117
      %p124 = scmp.eq.s32.totalorder %s23, 1
      %p125 = por %p123, %p124
      %p126 = scmp.ne.s32.totalorder %s117, %s118
      %p127 = scmp.eq.s32.totalorder %s23, 0
      %p128 = por %p126, %p127
      %p129 = scmp.ne.s32.totalorder %s117, %s118
      %p130 = scmp.eq.s32.totalorder %s24, 1
      %p131 = por %p129, %p130
      %p133 = scmp.ne.s32.totalorder %s118, %s132
      %p134 = scmp.eq.s32.totalorder %s24, 0
      %p135 = por %p133, %p134
      %s136 = ssub.s32 %s18, %s25
      %p137 = scmp.eq.s32.totalorder %s136, 0
      %s139 = sadd.s32 %s138, 1
      %s140 = scalar_select %p137, %s138, %s139
      %p143 = pneg %p137
      %p144 = scmp.eq.s32.totalorder %s18, 1
      %p145 = por %p143, %p144
      %p146 = scmp.ne.s32.totalorder %s138, %s141
      %p147 = scmp.eq.s32.totalorder %s18, 0
      %p148 = por %p146, %p147
      %p149 = scmp.ne.s32.totalorder %s138, %s141
      %p150 = scmp.eq.s32.totalorder %s23, 1
      %p151 = por %p149, %p150
      %p152 = scmp.ne.s32.totalorder %s141, %s142
      %p153 = scmp.eq.s32.totalorder %s23, 0
      %p154 = por %p152, %p153
      %p155 = scmp.ne.s32.totalorder %s141, %s142
      %p156 = scmp.eq.s32.totalorder %s24, 1
      %p157 = por %p155, %p156
      %p159 = scmp.ne.s32.totalorder %s142, %s158
      %p160 = scmp.eq.s32.totalorder %s24, 0
      %p161 = por %p159, %p160
      %p162 = scmp.le.s32.totalorder 1, %s18
      %p163 = scmp.lt.s32.totalorder %s18, 3
      %p164 = pnand %p162, %p163
      %p165 = pneg %p164
      // Predicated region
      $region9: #{tpu_custom_call.1} parent=5 // pred_check
        _
      $region10: #{tpu_custom_call.1} parent=5 // pred_check_branch
        %167 = sbr.rel (%p164) target = $region12
      $region11: #{tpu_custom_call.1} parent=5 // pred_region
        %s168 = ssub.s32 %s18, 1
        // Predicated region
        $region13: #{tpu_custom_call.1} parent=11 // pred_check
          %p169 = pneg %p65
        $region14: #{tpu_custom_call.1} parent=11 // pred_check_branch
          %171 = sbr.rel (%p169) target = $region16
        $region15: #{tpu_custom_call.1} parent=11 // pred_region
          %s173 = ssub.s32 1024, 1024
          %174 = vsyncadd [#allocation6], %s173
          %s175 = sshll.u32 [#allocation5], 4
          %s176 = int_to_ptr.vmem [resolvable:$true] %s175
          %181 = dma.hbm_to_vmem [thread:$0]  %s1, 1024, %s176, [#allocation6], 64, 64, 4
        $region16: #{tpu_custom_call.1} parent=11 // pred_fallthru
          _
        // Predicated region
        $region17: #{tpu_custom_call.1} parent=11 // pred_check
          %p182 = pneg %p86
        $region18: #{tpu_custom_call.1} parent=11 // pred_check_branch
          %184 = sbr.rel (%p182) target = $region20
        $region19: #{tpu_custom_call.1} parent=11 // pred_region
          _
        $region20: #{tpu_custom_call.1} parent=11 // pred_fallthru
          _
        // Predicated region
        $region21: #{tpu_custom_call.1} parent=11 // pred_check
          %p185 = pneg %p107
        $region22: #{tpu_custom_call.1} parent=11 // pred_check_branch
          %187 = sbr.rel (%p185) target = $region24
        $region23: #{tpu_custom_call.1} parent=11 // pred_region
          %s189 = ssub.s32 1024, 1024
          %190 = vsyncadd [#allocation6], %s189
          %s191 = sshll.u32 [#allocation7], 4
          %s192 = int_to_ptr.vmem [resolvable:$true] %s191
          %197 = dma.hbm_to_vmem [thread:$0]  %s3, 1024, %s192, [#allocation6], 64, 64, 4
        $region24: #{tpu_custom_call.1} parent=11 // pred_fallthru
          _
        // Predicated region
        $region25: #{tpu_custom_call.1} parent=11 // pred_check
          %p198 = pneg %p128
        $region26: #{tpu_custom_call.1} parent=11 // pred_check_branch
          %200 = sbr.rel (%p198) target = $region28
        $region27: #{tpu_custom_call.1} parent=11 // pred_region
          _
        $region28: #{tpu_custom_call.1} parent=11 // pred_fallthru
          _
      $region12: #{tpu_custom_call.1} parent=5 // pred_fallthru
        _
      %p201 = scmp.lt.s32.totalorder %s18, 2
      // Predicated region
      $region29: #{tpu_custom_call.1} parent=5 // pred_check
        %p202 = pneg %p201
      $region30: #{tpu_custom_call.1} parent=5 // pred_check_branch
        %204 = sbr.rel (%p202) target = $region32
      $region31: #{tpu_custom_call.1} parent=5 // pred_region
        // Predicated region
        $region33: #{tpu_custom_call.1} parent=31 // pred_check
          %p205 = pneg %p38
        $region34: #{tpu_custom_call.1} parent=31 // pred_check_branch
          %207 = sbr.rel (%p205) target = $region36
        $region35: #{tpu_custom_call.1} parent=31 // pred_region
          %s208 = sand.u32 %s28, 1
          %s209 = scalar_lea.sflag [#allocation3], %s208
          %s210 = sand.u32 %s28, 1
          %s211 = smul.addr %s210, 16
          %s212 = scalar_lea.vmem [#allocation2], %s211
          %s213 = smul.u32 4, %s18
          %s215 = ssub.s32 256, 256
          %216 = vsyncadd %s209, %s215
          %s217 = smul.addr %s213, 64
          %s218 = scalar_lea.hbm %s0, %s217
          %s219 = sshll.u32 %s212, 4
          %s220 = int_to_ptr.vmem [resolvable:$true] %s219
          %225 = dma.hbm_to_vmem [thread:$0]  %s218, 256, %s220, %s209, 64, 64, 4
        $region36: #{tpu_custom_call.1} parent=31 // pred_fallthru
          _
      $region32: #{tpu_custom_call.1} parent=5 // pred_fallthru
        _
      %p226 = scmp.le.s32.totalorder 1, %s18
      %p227 = scmp.lt.s32.totalorder %s18, 3
      %p228 = pnand %p226, %p227
      %p229 = pneg %p228
      // Predicated region
      $region37: #{tpu_custom_call.1} parent=5 // pred_check
        _
      $region38: #{tpu_custom_call.1} parent=5 // pred_check_branch
        %231 = sbr.rel (%p228) target = $region40
      $region39: #{tpu_custom_call.1} parent=5 // pred_region
        %s232 = ssub.s32 %s18, 1
        %s233 = sand.u32 %s31, 1
        %s234 = scalar_lea.sflag [#allocation3], %s233
        %s235 = sand.u32 %s31, 1
        %s236 = smul.addr %s235, 16
        %s237 = scalar_lea.vmem [#allocation2], %s236
        // Predicated region
        $region41: #{tpu_custom_call.1} parent=39 // pred_check
          %p238 = pneg %p44
        $region42: #{tpu_custom_call.1} parent=39 // pred_check_branch
          %240 = sbr.rel (%p238) target = $region44
        $region43: #{tpu_custom_call.1} parent=39 // pred_region
          %241 = dma.done %s234, 256
        $region44: #{tpu_custom_call.1} parent=39 // pred_fallthru
          _
        // Predicated region
        $region45: #{tpu_custom_call.1} parent=39 // pred_check
          %p242 = pneg %p65
        $region46: #{tpu_custom_call.1} parent=39 // pred_check_branch
          %244 = sbr.rel (%p242) target = $region48
        $region47: #{tpu_custom_call.1} parent=39 // pred_region
          %245 = dma.done [#allocation6], 1024
        $region48: #{tpu_custom_call.1} parent=39 // pred_fallthru
          _
        // Predicated region
        $region49: #{tpu_custom_call.1} parent=39 // pred_check
          %p246 = pneg %p107
        $region50: #{tpu_custom_call.1} parent=39 // pred_check_branch
          %248 = sbr.rel (%p246) target = $region52
        $region51: #{tpu_custom_call.1} parent=39 // pred_region
          %249 = dma.done [#allocation6], 1024
        $region52: #{tpu_custom_call.1} parent=39 // pred_fallthru
          _
        %s250 = sand.u32 %s31, 1
        %s251 = scalar_lea.sflag [#allocation3], %s250
        %s252 = sand.u32 %s31, 1
        %s253 = smul.addr %s252, 16
        %s254 = scalar_lea.vmem [#allocation2], %s253
        %p255 = pneg %p44
        %p256 = pneg %p41
        %p257 = pneg %p65
        %p258 = pneg %p62
        %p259 = pneg %p86
        %p260 = pneg %p83
        %p261 = pneg %p107
        %p262 = pneg %p104
        %p263 = pneg %p128
        %p264 = pneg %p125
        %p265 = pneg %p154
        %p266 = pneg %p151
        %s267 = sand.u32 %s141, 1
        %s268 = scalar_lea.sflag [#allocation4], %s267
        %s269 = sand.u32 %s141, 1
        %s270 = smul.addr %s269, 32
        %s271 = scalar_lea.vmem [#allocation8], %s270
        %s272 = smul.u32 4, %s23
        %s273 = smul.u32 4, %s23
        %v275 = vld [vmem:[%s237] sm:$0xf]
        %v276 = vld [vmem:[%s237 + $0x4] sm:$0xf]
        %v277 = vld [vmem:[%s237 + $0x8] sm:$0xf]
        %v278 = vld [vmem:[%s237 + $0xc] sm:$0xf]
        %v279 = vld [vmem:[#allocation5] sm:$0xf]
        %v280 = vld [vmem:[#allocation5 + $0x4] sm:$0xf]
        %v281 = vld [vmem:[#allocation5 + $0x8] sm:$0xf]
        %v282 = vld [vmem:[#allocation5 + $0xc] sm:$0xf]
        %v283 = vld [vmem:[#allocation5 + $0x10] sm:$0xf]
        %v284 = vld [vmem:[#allocation5 + $0x14] sm:$0xf]
        %v285 = vld [vmem:[#allocation5 + $0x18] sm:$0xf]
        %v286 = vld [vmem:[#allocation5 + $0x1c] sm:$0xf]
        %v287 = vld [vmem:[#allocation5 + $0x20] sm:$0xf]
        %v288 = vld [vmem:[#allocation5 + $0x24] sm:$0xf]
        %v289 = vld [vmem:[#allocation5 + $0x28] sm:$0xf]
        %v290 = vld [vmem:[#allocation5 + $0x2c] sm:$0xf]
        %v291 = vld [vmem:[#allocation5 + $0x30] sm:$0xf]
        %v292 = vld [vmem:[#allocation5 + $0x34] sm:$0xf]
        %v293 = vld [vmem:[#allocation5 + $0x38] sm:$0xf]
        %v294 = vld [vmem:[#allocation5 + $0x3c] sm:$0xf]
        %v295 = vld [vmem:[%s2] sm:$0x1]
        %v297 = vlaneseq
        %v298 = vshrl.u32 %v297, 7
        %v299 = vsub.s32 0, %v298
        %v300 = vrot.slane %v295, %v299
        %v306 = vunpack.c.l.b16 %v275
        %v307 = vunpack.c.l.b16 %v276
        %v308 = vunpack.c.l.b16 %v277
        %v309 = vunpack.c.l.b16 %v278
        %v310 = vpack.c.b16 %v307, %v306
        %v311 = vpack.c.b16 %v309, %v308
        %v330 = vunpack.c.l.b16 %v279
        %v331 = vunpack.c.l.b16 %v280
        %v332 = vunpack.c.l.b16 %v281
        %v333 = vunpack.c.l.b16 %v282
        %v334 = vunpack.c.l.b16 %v283
        %v335 = vunpack.c.l.b16 %v284
        %v336 = vunpack.c.l.b16 %v285
        %v337 = vunpack.c.l.b16 %v286
        %v338 = vunpack.c.l.b16 %v287
        %v339 = vunpack.c.l.b16 %v288
        %v340 = vunpack.c.l.b16 %v289
        %v341 = vunpack.c.l.b16 %v290
        %v342 = vunpack.c.l.b16 %v291
        %v343 = vunpack.c.l.b16 %v292
        %v344 = vunpack.c.l.b16 %v293
        %v345 = vunpack.c.l.b16 %v294
        %v346 = vpack.c.b16 %v331, %v330
        %v347 = vpack.c.b16 %v333, %v332
        %v348 = vpack.c.b16 %v335, %v334
        %v349 = vpack.c.b16 %v337, %v336
        %v350 = vpack.c.b16 %v339, %v338
        %v351 = vpack.c.b16 %v341, %v340
        %v352 = vpack.c.b16 %v343, %v342
        %v353 = vpack.c.b16 %v345, %v344
        %362 = vmatprep.subr.bf16.mxu0 0
        %363 = vmatpush1.bf16.msra.mxu0 %v346
        %364 = vmatprep.subr.bf16.mxu0 0
        %365 = vmatpush1.bf16.msra.mxu0 %v347
        %366 = vmatprep.subr.bf16.mxu0 0
        %367 = vmatpush1.bf16.msra.mxu0 %v348
        %368 = vmatprep.subr.bf16.mxu0 0
        %369 = vmatpush1.bf16.msra.mxu0 %v349
        %370 = vmatprep.subr.bf16.mxu0 0
        %371 = vmatpush1.bf16.msra.mxu0 %v350
        %372 = vmatprep.subr.bf16.mxu0 0
        %373 = vmatpush1.bf16.msra.mxu0 %v351
        %374 = vmatprep.subr.bf16.mxu0 0
        %375 = vmatpush1.bf16.msra.mxu0 %v352
        %376 = vmatprep.subr.bf16.mxu0 0
        %377 = vmatpush1.bf16.msra.mxu0 %v353
        %378 = vmatprep.subr.bf16.mxu0 0
        %379 = vmatpush1.bf16.msra.mxu0 0
        %380 = vmatprep.subr.bf16.mxu0 0
        %381 = vmatpush1.bf16.msra.mxu0 0
        %382 = vmatprep.subr.bf16.mxu0 0
        %383 = vmatpush1.bf16.msra.mxu0 0
        %384 = vmatprep.subr.bf16.mxu0 0
        %385 = vmatpush1.bf16.msra.mxu0 0
        %386 = vmatprep.subr.bf16.mxu0 0
        %387 = vmatpush1.bf16.msra.mxu0 0
        %388 = vmatprep.subr.bf16.mxu0 0
        %389 = vmatpush1.bf16.msra.mxu0 0
        %390 = vmatprep.subr.bf16.mxu0 0
        %391 = vmatpush1.bf16.msra.mxu0 0
        %392 = vmatprep.subr.bf16.mxu0 0
        %393 = vmatpush1.bf16.msra.mxu0 0
        %394 = vmatprep.mubr.bf16.mxu0 0
        %395 = vmatmul.mubr.bf16.gmra.mrb[0].mxu0 %v310
        %v396 = vpop.f32.mrb[0].mxu0
        %v397 = vadd.f32 %v300, %v396
        %v398 = vpop.f32.mrb[0].mxu0
        %v399 = vpop.f32.mrb[0].mxu0
        %v400 = vadd.f32 %v300, %v399
        %v401 = vpop.f32.mrb[0].mxu0
        %402 = vmatprep.mubr.bf16.mxu0 0
        %403 = vmatmul.mubr.bf16.gmra.mrb[0].mxu0 %v311
        %v404 = vpop.f32.mrb[0].mxu0
        %v405 = vadd.f32 %v300, %v404
        %v406 = vpop.f32.mrb[0].mxu0
        %v407 = vpop.f32.mrb[0].mxu0
        %v408 = vadd.f32 %v300, %v407
        %v409 = vpop.f32.mrb[0].mxu0
        %410 = vdwg.mxu0
        %v411 = vmax.f32 %v397, 0.0
        %v412 = vmax.f32 %v400, 0.0
        %v413 = vmax.f32 %v405, 0.0
        %v414 = vmax.f32 %v408, 0.0
        %v415 = vpack.c.bf16 %v412, %v411
        %v416 = vpack.c.bf16 %v414, %v413
        %v417 = vld [vmem:[#allocation7] sm:$0xf]
        %v418 = vld [vmem:[#allocation7 + $0x4] sm:$0xf]
        %v419 = vld [vmem:[#allocation7 + $0x8] sm:$0xf]
        %v420 = vld [vmem:[#allocation7 + $0xc] sm:$0xf]
        %v421 = vld [vmem:[#allocation7 + $0x10] sm:$0xf]
        %v422 = vld [vmem:[#allocation7 + $0x14] sm:$0xf]
        %v423 = vld [vmem:[#allocation7 + $0x18] sm:$0xf]
        %v424 = vld [vmem:[#allocation7 + $0x1c] sm:$0xf]
        %v425 = vld [vmem:[#allocation7 + $0x20] sm:$0xf]
        %v426 = vld [vmem:[#allocation7 + $0x24] sm:$0xf]
        %v427 = vld [vmem:[#allocation7 + $0x28] sm:$0xf]
        %v428 = vld [vmem:[#allocation7 + $0x2c] sm:$0xf]
        %v429 = vld [vmem:[#allocation7 + $0x30] sm:$0xf]
        %v430 = vld [vmem:[#allocation7 + $0x34] sm:$0xf]
        %v431 = vld [vmem:[#allocation7 + $0x38] sm:$0xf]
        %v432 = vld [vmem:[#allocation7 + $0x3c] sm:$0xf]
        %v433 = vld [vmem:[%s4] sm:$0x1]
        %v435 = vlaneseq
        %v436 = vshrl.u32 %v435, 7
        %v437 = vsub.s32 0, %v436
        %v438 = vrot.slane %v433, %v437
        %v456 = vunpack.c.l.b16 %v417
        %v457 = vunpack.c.l.b16 %v418
        %v458 = vunpack.c.l.b16 %v419
        %v459 = vunpack.c.l.b16 %v420
        %v460 = vunpack.c.l.b16 %v421
        %v461 = vunpack.c.l.b16 %v422
        %v462 = vunpack.c.l.b16 %v423
        %v463 = vunpack.c.l.b16 %v424
        %v464 = vunpack.c.l.b16 %v425
        %v465 = vunpack.c.l.b16 %v426
        %v466 = vunpack.c.l.b16 %v427
        %v467 = vunpack.c.l.b16 %v428
        %v468 = vunpack.c.l.b16 %v429
        %v469 = vunpack.c.l.b16 %v430
        %v470 = vunpack.c.l.b16 %v431
        %v471 = vunpack.c.l.b16 %v432
        %v472 = vpack.c.b16 %v457, %v456
        %v473 = vpack.c.b16 %v459, %v458
        %v474 = vpack.c.b16 %v461, %v460
        %v475 = vpack.c.b16 %v463, %v462
        %v476 = vpack.c.b16 %v465, %v464
        %v477 = vpack.c.b16 %v467, %v466
        %v478 = vpack.c.b16 %v469, %v468
        %v479 = vpack.c.b16 %v471, %v470
        %488 = vmatprep.subr.bf16.mxu0 0
        %489 = vmatpush1.bf16.msra.mxu0 %v472
        %490 = vmatprep.subr.bf16.mxu0 0
        %491 = vmatpush1.bf16.msra.mxu0 %v473
        %492 = vmatprep.subr.bf16.mxu0 0
        %493 = vmatpush1.bf16.msra.mxu0 %v474
        %494 = vmatprep.subr.bf16.mxu0 0
        %495 = vmatpush1.bf16.msra.mxu0 %v475
        %496 = vmatprep.subr.bf16.mxu0 0
        %497 = vmatpush1.bf16.msra.mxu0 %v476
        %498 = vmatprep.subr.bf16.mxu0 0
        %499 = vmatpush1.bf16.msra.mxu0 %v477
        %500 = vmatprep.subr.bf16.mxu0 0
        %501 = vmatpush1.bf16.msra.mxu0 %v478
        %502 = vmatprep.subr.bf16.mxu0 0
        %503 = vmatpush1.bf16.msra.mxu0 %v479
        %504 = vmatprep.subr.bf16.mxu0 0
        %505 = vmatpush1.bf16.msra.mxu0 0
        %506 = vmatprep.subr.bf16.mxu0 0
        %507 = vmatpush1.bf16.msra.mxu0 0
        %508 = vmatprep.subr.bf16.mxu0 0
        %509 = vmatpush1.bf16.msra.mxu0 0
        %510 = vmatprep.subr.bf16.mxu0 0
        %511 = vmatpush1.bf16.msra.mxu0 0
        %512 = vmatprep.subr.bf16.mxu0 0
        %513 = vmatpush1.bf16.msra.mxu0 0
        %514 = vmatprep.subr.bf16.mxu0 0
        %515 = vmatpush1.bf16.msra.mxu0 0
        %516 = vmatprep.subr.bf16.mxu0 0
        %517 = vmatpush1.bf16.msra.mxu0 0
        %518 = vmatprep.subr.bf16.mxu0 0
        %519 = vmatpush1.bf16.msra.mxu0 0
        %520 = vmatprep.mubr.bf16.mxu0 0
        %521 = vmatmul.mubr.bf16.gmra.mrb[0].mxu0 %v415
        %v522 = vpop.f32.mrb[0].mxu0
        %v523 = vadd.f32 %v438, %v522
        %v524 = vpop.f32.mrb[0].mxu0
        %v525 = vpop.f32.mrb[0].mxu0
        %v526 = vadd.f32 %v438, %v525
        %v527 = vpop.f32.mrb[0].mxu0
        %528 = vmatprep.mubr.bf16.mxu0 0
        %529 = vmatmul.mubr.bf16.gmra.mrb[0].mxu0 %v416
        %v530 = vpop.f32.mrb[0].mxu0
        %v531 = vadd.f32 %v438, %v530
        %v532 = vpop.f32.mrb[0].mxu0
        %v533 = vpop.f32.mrb[0].mxu0
        %v534 = vadd.f32 %v438, %v533
        %v535 = vpop.f32.mrb[0].mxu0
        %536 = vdwg.mxu0
        %v537 = vsub.f32 0.0, %v523
        %v538 = vsub.f32 0.0, %v526
        %v539 = vsub.f32 0.0, %v531
        %v540 = vsub.f32 0.0, %v534
        %v541 = vmul.f32 %v537, 1.442695
        %v542 = vpow.pop %v541
        %v543 = vmul.f32 %v538, 1.442695
        %v544 = vpow.pop %v543
        %v545 = vmul.f32 %v539, 1.442695
        %v546 = vpow.pop %v545
        %v547 = vmul.f32 %v540, 1.442695
        %v548 = vpow.pop %v547
        %v549 = vadd.f32 %v542, 1.0
        %v550 = vadd.f32 %v544, 1.0
        %v551 = vadd.f32 %v546, 1.0
        %v552 = vadd.f32 %v548, 1.0
        %v553 = vrcp.pop %v549
        %v554 = vrcp.pop %v550
        %v555 = vrcp.pop %v551
        %v556 = vrcp.pop %v552
        %557 = vst [vmem:[%s271] sm:$0xff] %v553
        %558 = vst [vmem:[%s271 + $0x8] sm:$0xff] %v554
        %559 = vst [vmem:[%s271 + $0x10] sm:$0xff] %v555
        %560 = vst [vmem:[%s271 + $0x18] sm:$0xff] %v556
        %s561 = sand.u32 %s141, 1
        %s562 = scalar_lea.sflag [#allocation4], %s561
        %s563 = sand.u32 %s141, 1
        %s564 = smul.addr %s563, 32
        %s565 = scalar_lea.vmem [#allocation8], %s564
        // Predicated region
        $region53: #{tpu_custom_call.1} parent=39 // pred_check
          %p566 = pneg %p151
        $region54: #{tpu_custom_call.1} parent=39 // pred_check_branch
          %568 = sbr.rel (%p566) target = $region56
        $region55: #{tpu_custom_call.1} parent=39 // pred_region
          %s569 = smul.u32 4, %s23
          %s571 = ssub.s32 512, 512
          %572 = vsyncadd %s562, %s571
          %s573 = smul.addr %s569, 128
          %s574 = scalar_lea.hbm %s5, %s573
          %s575 = sshll.u32 %s565, 4
          %s576 = int_to_ptr.vmem [resolvable:$true] %s575
          %581 = dma.vmem_to_hbm [thread:$0]  %s576, 512, %s574, %s562, 128, 128, 8
        $region56: #{tpu_custom_call.1} parent=39 // pred_fallthru
          _
      $region40: #{tpu_custom_call.1} parent=5 // pred_fallthru
        _
      %p582 = scmp.le.s32.totalorder 2, %s18
      // Predicated region
      $region57: #{tpu_custom_call.1} parent=5 // pred_check
        %p583 = pneg %p582
      $region58: #{tpu_custom_call.1} parent=5 // pred_check_branch
        %585 = sbr.rel (%p583) target = $region60
      $region59: #{tpu_custom_call.1} parent=5 // pred_region
        %s586 = ssub.s32 %s18, 2
        // Predicated region
        $region61: #{tpu_custom_call.1} parent=59 // pred_check
          %p587 = pneg %p157
        $region62: #{tpu_custom_call.1} parent=59 // pred_check_branch
          %589 = sbr.rel (%p587) target = $region64
        $region63: #{tpu_custom_call.1} parent=59 // pred_region
          %s590 = sand.u32 %s142, 1
          %s591 = scalar_lea.sflag [#allocation4], %s590
          %s592 = sand.u32 %s142, 1
          %s593 = smul.addr %s592, 32
          %s594 = scalar_lea.vmem [#allocation8], %s593
          %595 = dma.done %s591, 512
        $region64: #{tpu_custom_call.1} parent=59 // pred_fallthru
          _
      $region60: #{tpu_custom_call.1} parent=5 // pred_fallthru
        _
    $region6: #{tpu_custom_call.1} parent=1 // loop_footer
      %s22 = sadd.s32 1, %s18
    $region7: #{tpu_custom_call.1} parent=1 // loop_footer_branch
      %17 = sbr.rel target = $region3
    $region8: #{tpu_custom_call.1} parent=1 // loop_exit
      _
    %596 = vsyncpa [#allocation3], 1
    %s597 = scalar_lea.sflag [#allocation3], 1
    %598 = vsyncpa %s597, 1
    %599 = vsyncpa [#allocation6], 1
    %600 = vsyncpa [#allocation4], 1
    %s601 = scalar_lea.sflag [#allocation4], 1
    %602 = vsyncpa %s601, 1

</llo_original>
